<compile_context>
chip_gen: v5e
topology: v5e:2x2
jax: 0.10.0
libtpu: 0.0.40
codegen_flags: <defaults>
</compile_context>

<pallas_src>
import math

import jax
import jax.numpy as jnp
from jax import lax
from jax.experimental import pallas as pl
from jax.experimental.pallas import tpu as pltpu


def _round_up(v: int, m: int) -> int:
    return ((v + m - 1) // m) * m


def _default_vmem_limit_bytes() -> int:
    """Per-generation VMEM budget: ~112 MiB on 128-MiB parts (v5e/v6e), ~56 MiB on v7x."""
    try:
        phys = int(pltpu.get_tpu_info().vmem_capacity_bytes)
    except Exception:
        phys = 64 * 1024 * 1024          # conservative fallback (v7x per-TensorCore VMEM)
    return min(phys - (8 << 20), 112 << 20)


def _choose_tiles(B, C_in, T, C_out, x_bytes, aux_bytes, budget, batch_tile, cout_tile):
    """Pick (TB, TC).  When C_out is tiled, TC is a multiple of 128 (lane/MXU aligned);
    otherwise TC == C_out (block == full dim, legal for any dtype).  Shrinks TC first,
    then TB, until the double-buffered working set fits the VMEM budget."""
    TB = min(batch_tile, B) if batch_tile is not None else min(8, B)
    if cout_tile is not None and cout_tile < C_out:
        TC = min(_round_up(cout_tile, 32), C_out)
    else:
        TC = C_out

    def fits(tb, tc):
        x_blk = tb * C_in * T * x_bytes            # input tile
        w_blk = 2 * tc * C_in * 2                  # bf16 fused weight tile
        b_blk = 2 * tc * 4
        aux_blk = tb * tc * T * aux_bytes          # each of norm_att / cla tiles
        out_blk = tb * tc * 4
        temps = 8 * tc * T * 4 + C_in * T * 2      # in-kernel f32 temporaries + bf16 row cast
        need = 2 * x_blk + 2 * (w_blk + b_blk) + 2 * (2 * aux_blk + out_blk) + temps
        return need <= budget

    while not fits(TB, TC):
        if TC > 128:
            new_tc = max(128, _round_up(TC // 2, 128))
            TC = new_tc if new_tc < TC else 128
        elif TB > 1:
            TB = max(1, TB // 2)
        else:
            break
    return TB, TC


def _make_kernel(activation: str, tb: int, tc: int, unroll):
    """Per-grid-step kernel; `activation`, `tb`, `tc`, `unroll` are trace-time constants."""

    def kernel(x_ref, w_ref, b_ref, out_ref, natt_ref, cla_ref):
        # x_ref   : (TB, C_in, T)   input dtype (f32 or bf16)
        # w_ref   : (2*TC, C_in)    bf16; rows [0:TC] = att, [TC:2*TC] = cla
        # b_ref   : (2*TC, 1)       f32
        # out_ref : (TB, TC, 1)     f32  (pooled; squeezed to (B, C_out) in the wrapper)
        # natt_ref: (TB, TC, T)     aux dtype
        # cla_ref : (TB, TC, T)     aux dtype
        t = x_ref.shape[-1]

        # Hoisted out of the per-row loop (JAX does not CSE broadcast_in_dim).
        w = w_ref[...]
        bias = jnp.broadcast_to(b_ref[...], (2 * tc, t)).astype(jnp.float32)

        def body(b, carry):
            # In-kernel bf16 cast of this row (no separate wrapper-side pass over x in HBM).
            xb = x_ref[b].astype(jnp.bfloat16)                              # (C_in, T)

            # Fused att+cla 1x1 conv: one bf16 MXU matmul, f32 accumulation.
            y = jnp.dot(w, xb, preferred_element_type=jnp.float32) + bias   # (2*TC, T)
            att = y[:tc]
            cla = y[tc:]

            # softmax(tanh(att)) over T.  tanh is in [-1, 1] and softmax is shift-
            # invariant, so a constant shift replaces the cross-lane max reduction.
            e = jnp.exp(jnp.tanh(att) - 1.0)                                # (TC, T)
            # Exact reciprocal: the denominator is a tiny (TC, 1) vector and consumers
            # expect a true softmax (rows sum to 1).
            inv = 1.0 / jnp.sum(e, axis=-1, keepdims=True)                  # (TC, 1)

            if activation == "sigmoid":
                cla = jax.nn.sigmoid(cla)
            # 'linear' -> identity

            # Fused attention pooling while e / cla are live in VMEM/vregs:
            #   sum(norm_att * cla, T) == sum(e * cla, T) * inv   (inv constant over T)
            pooled = jnp.sum(e * cla, axis=-1, keepdims=True) * inv         # (TC, 1)

            natt_ref[b] = (e * inv).astype(natt_ref.dtype)
            cla_ref[b] = cla.astype(cla_ref.dtype)
            out_ref[b] = pooled.astype(out_ref.dtype)
            return carry

        lax.fori_loop(0, tb, body, 0, unroll=unroll)

    return kernel


def att_block_v2(x, w_att, b_att, w_cla, b_cla, activation: str = "linear", *,
                 batch_tile=None, cout_tile=None, aux_dtype=jnp.bfloat16,
                 vmem_limit_bytes=None):
    """AttBlockV2 forward.

    x: (B, C_in, T) float32 or bfloat16; w_*: (C_out, C_in); b_*: (C_out,).
    Returns (out (B, C_out) f32, norm_att (B, C_out, T), cla (B, C_out, T)); norm_att
    and cla are stored in `aux_dtype` (bf16 by default to halve writeback bytes)."""
    if activation not in ("linear", "sigmoid"):
        raise ValueError(f"unsupported activation: {activation!r}")

    B, C_in, T = x.shape
    C_out = w_att.shape[0]

    vmem_limit = int(vmem_limit_bytes) if vmem_limit_bytes else _default_vmem_limit_bytes()
    TB, TC = _choose_tiles(B, C_in, T, C_out,
                           jnp.dtype(x.dtype).itemsize, jnp.dtype(aux_dtype).itemsize,
                           int(vmem_limit * 0.9), batch_tile, cout_tile)
    n_bt = pl.cdiv(B, TB)
    n_ct = pl.cdiv(C_out, TC)
    c_pad = n_ct * TC

    # Pre-tile the fused weight/bias on the host: tile j = [att rows j*TC:(j+1)*TC ;
    # cla rows j*TC:(j+1)*TC], zero-padded so every tile is full.  The C_out grid axis
    # then selects matching att/cla blocks with a plain rectangular BlockSpec.
    def _prep_w(wm):
        wm = wm.astype(jnp.bfloat16)
        if c_pad != C_out:
            wm = jnp.pad(wm, ((0, c_pad - C_out), (0, 0)))
        return wm.reshape(n_ct, TC, C_in)

    def _prep_b(bv):
        bv = bv.astype(jnp.float32)
        if c_pad != C_out:
            bv = jnp.pad(bv, (0, c_pad - C_out))
        return bv.reshape(n_ct, TC, 1)

    w_tiles = jnp.concatenate([_prep_w(w_att), _prep_w(w_cla)], axis=1)   # (n_ct, 2*TC, C_in)
    b_tiles = jnp.concatenate([_prep_b(b_att), _prep_b(b_cla)], axis=1)   # (n_ct, 2*TC, 1)

    # Unroll the per-row loop only when a row's working set is tiny; at production
    # shapes each row already saturates the MXU and unrolling just inflates live ranges.
    unroll = bool(C_in * T * 4 <= 256 * 1024)

    kernel = _make_kernel(activation, TB, TC, unroll)

    # Single-buffer weight/bias when their block index never changes (one C_out tile)
    # and the VMEM saving is worth it.
    wb_kwargs = {}
    if n_ct == 1 and int(w_tiles.size) * 2 >= (1 << 20):
        wb_kwargs = dict(pipeline_mode=pl.Buffered(1))

    out3, norm_att, cla = pl.pallas_call(
        kernel,
        out_shape=(
            jax.ShapeDtypeStruct((B, C_out, 1), jnp.float32),   # pooled (squeezed below)
            jax.ShapeDtypeStruct((B, C_out, T), aux_dtype),     # norm_att
            jax.ShapeDtypeStruct((B, C_out, T), aux_dtype),     # cla
        ),
        grid_spec=pltpu.PrefetchScalarGridSpec(
            num_scalar_prefetch=0,
            grid=(n_bt, n_ct),
            in_specs=[
                pl.BlockSpec((TB, C_in, T), lambda i, j: (i, 0, 0)),            # x rows (resident across j)
                pl.BlockSpec((None, 2 * TC, C_in), lambda i, j: (j, 0, 0), **wb_kwargs),
                pl.BlockSpec((None, 2 * TC, 1), lambda i, j: (j, 0, 0), **wb_kwargs),
            ],
            out_specs=[
                pl.BlockSpec((TB, TC, 1), lambda i, j: (i, j, 0)),
                pl.BlockSpec((TB, TC, T), lambda i, j: (i, j, 0)),
                pl.BlockSpec((TB, TC, T), lambda i, j: (i, j, 0)),
            ],
        ),
        compiler_params=pltpu.CompilerParams(
            # Both axes are independent (softmax is over T only) and no output block is
            # revisited.  On v7x (2 TensorCores) switch one axis to pltpu.CORE_PARALLEL
            # to shard across cores; on v5e/v6e (1 TC) "parallel" is sufficient.
            dimension_semantics=("parallel", "parallel"),
            vmem_limit_bytes=int(vmem_limit),
        ),
    )(x, w_tiles, b_tiles)

    # TODO(synk): on v7x, fp8 (e4m3) operands for the fused matmul (keeping f32
    # accumulation) would raise MXU throughput further if the head tolerates it.
    return out3[:, :, 0], norm_att, cla


def xavier_uniform(key, out_features, in_features):
    """Matches nn.init.xavier_uniform_ on a Conv1d weight (out, in, k=1)."""
    fan_in, fan_out = in_features, out_features
    bound = math.sqrt(6.0 / (fan_in + fan_out))
    return jax.random.uniform(key, (out_features, in_features),
                              minval=-bound, maxval=bound, dtype=jnp.float32)


def reference(x, w_att, b_att, w_cla, b_cla, activation):
    att = jnp.einsum("oi,bit->bot", w_att, x) + b_att[None, :, None]
    norm_att = jax.nn.softmax(jnp.tanh(att), axis=-1)
    cla = jnp.einsum("oi,bit->bot", w_cla, x) + b_cla[None, :, None]
    if activation == "sigmoid":
        cla = jax.nn.sigmoid(cla)
    out = jnp.sum(norm_att * cla, axis=2)
    return out, norm_att, cla


if __name__ == "__main__":
    B, C_IN, C_OUT, T = 2, 32, 8, 16
    ACTIVATION = "sigmoid"   # module supports 'linear' or 'sigmoid'

    key = jax.random.PRNGKey(0)
    kx, ka, kc = jax.random.split(key, 3)

    x = jax.random.normal(kx, (B, C_IN, T), dtype=jnp.float32)
    w_att = xavier_uniform(ka, C_OUT, C_IN)
    w_cla = xavier_uniform(kc, C_OUT, C_IN)
    b_att = jnp.zeros((C_OUT,), jnp.float32)   # init_layer fills bias with 0
    b_cla = jnp.zeros((C_OUT,), jnp.float32)

    out, norm_att, cla = att_block_v2(x, w_att, b_att, w_cla, b_cla, ACTIVATION)
    jax.block_until_ready((out, norm_att, cla))

    # Pure-JAX reference on bf16-rounded operands (kernel feeds the MXU bf16, f32 accum).
    xr = x.astype(jnp.bfloat16).astype(jnp.float32)
    wa = w_att.astype(jnp.bfloat16).astype(jnp.float32)
    wc = w_cla.astype(jnp.bfloat16).astype(jnp.float32)
    ref_out, ref_natt, ref_cla = reference(xr, wa, b_att, wc, b_cla, ACTIVATION)

    assert out.shape == (B, C_OUT) and out.dtype == jnp.float32
    assert norm_att.shape == (B, C_OUT, T)
    assert cla.shape == (B, C_OUT, T)
    # Pooled output uses f32 internal math -> tight tolerance; norm_att/cla are stored
    # in bf16 by default -> looser tolerance.
    assert jnp.allclose(out, ref_out, atol=5e-3, rtol=5e-3)
    assert jnp.allclose(norm_att.astype(jnp.float32), ref_natt, atol=1e-2, rtol=2e-2)
    assert jnp.allclose(cla.astype(jnp.float32), ref_cla, atol=1e-2, rtol=2e-2)

    print("KERNEL_OK")
</pallas_src>

<mosaic_0001>
module attributes {stable_mosaic.version = 11 : i64} {
  func.func @kernel(%arg0: i32, %arg1: i32, %arg2: memref<2x32x16xf32, #tpu.memory_space<vmem>>, %arg3: memref<1x16x32xbf16, #tpu.memory_space<vmem>>, %arg4: memref<1x16x1xf32, #tpu.memory_space<vmem>>, %arg5: memref<2x8x1xf32, #tpu.memory_space<vmem>>, %arg6: memref<2x8x16xbf16, #tpu.memory_space<vmem>>, %arg7: memref<2x8x16xbf16, #tpu.memory_space<vmem>>) attributes {dimension_semantics = [#tpu.dimension_semantics<parallel>, #tpu.dimension_semantics<parallel>], iteration_bounds = array<i64: 1, 1>, scalar_prefetch = 0 : i64, scratch_operands = 0 : i64, tpu.core_type = #tpu.core_type<tc>, window_params = [{transform_indices = @transform_0, window_bounds = array<i64: 2, 32, 16>}, {transform_indices = @transform_1, window_bounds = array<i64: 1, 16, 32>}, {transform_indices = @transform_2, window_bounds = array<i64: 1, 16, 1>}, {transform_indices = @transform_3, window_bounds = array<i64: 2, 8, 1>}, {transform_indices = @transform_4, window_bounds = array<i64: 2, 8, 16>}, {transform_indices = @transform_5, window_bounds = array<i64: 2, 8, 16>}]} {
    %c0 = arith.constant 0 : index
    %c0_0 = arith.constant 0 : index
    %c0_1 = arith.constant 0 : index
    %0 = vector.load %arg3[%c0, %c0_0, %c0_1] : memref<1x16x32xbf16, #tpu.memory_space<vmem>>, vector<1x16x32xbf16>
    %1 = vector.shape_cast %0 : vector<1x16x32xbf16> to vector<16x32xbf16>
    %c0_2 = arith.constant 0 : index
    %c0_3 = arith.constant 0 : index
    %c0_4 = arith.constant 0 : index
    %2 = vector.load %arg4[%c0_2, %c0_3, %c0_4] : memref<1x16x1xf32, #tpu.memory_space<vmem>>, vector<1x16x1xf32>
    %3 = vector.shape_cast %2 : vector<1x16x1xf32> to vector<16x1xf32>
    %4 = vector.shape_cast %3 : vector<16x1xf32> to vector<16x1xf32>
    %5 = vector.broadcast %4 : vector<16x1xf32> to vector<16x16xf32>
    %c0_i32 = arith.constant 0 : i32
    %6 = arith.index_cast %c0_i32 : i32 to index
    %c0_5 = arith.constant 0 : index
    %c0_6 = arith.constant 0 : index
    %7 = vector.load %arg2[%6, %c0_5, %c0_6] : memref<2x32x16xf32, #tpu.memory_space<vmem>>, vector<1x32x16xf32>
    %8 = vector.shape_cast %7 : vector<1x32x16xf32> to vector<32x16xf32>
    %9 = arith.truncf %8 : vector<32x16xf32> to vector<32x16xbf16>
    %cst = arith.constant dense<0.000000e+00> : vector<16x16xf32>
    %10 = tpu.matmul %1, %9, %cst {dimension_numbers = #tpu.dot_dimension_numbers<[1], [0], [0], [1], [0, 0, 1, 1], [], []>} : vector<16x32xbf16>, vector<32x16xbf16>, vector<16x16xf32> -> vector<16x16xf32>
    %11 = arith.addf %10, %5 : vector<16x16xf32>
    %12 = vector.extract_strided_slice %11 {offsets = [0, 0], sizes = [8, 16], strides = [1, 1]} : vector<16x16xf32> to vector<8x16xf32>
    %13 = vector.extract_strided_slice %11 {offsets = [8, 0], sizes = [8, 16], strides = [1, 1]} : vector<16x16xf32> to vector<8x16xf32>
    %14 = math.tanh %12 : vector<8x16xf32>
    %cst_7 = arith.constant 1.000000e+00 : f32
    %15 = vector.broadcast %cst_7 : f32 to vector<8x16xf32>
    %16 = arith.subf %14, %15 : vector<8x16xf32>
    %17 = math.exp %16 : vector<8x16xf32>
    %cst_8 = arith.constant dense<0.000000e+00> : vector<8xf32>
    %18 = vector.multi_reduction <add>, %17, %cst_8 [1] : vector<8x16xf32> to vector<8xf32>
    %19 = vector.shape_cast %18 : vector<8xf32> to vector<8x1xf32>
    %cst_9 = arith.constant 1.000000e+00 : f32
    %20 = vector.broadcast %cst_9 : f32 to vector<8x1xf32>
    %21 = arith.divf %20, %19 : vector<8x1xf32>
    %22 = arith.negf %13 : vector<8x16xf32>
    %23 = math.exp %22 : vector<8x16xf32>
    %cst_10 = arith.constant 1.000000e+00 : f32
    %24 = vector.broadcast %cst_10 : f32 to vector<8x16xf32>
    %25 = arith.addf %24, %23 : vector<8x16xf32>
    %26 = arith.divf %24, %25 : vector<8x16xf32>
    %27 = arith.mulf %17, %26 : vector<8x16xf32>
    %cst_11 = arith.constant dense<0.000000e+00> : vector<8xf32>
    %28 = vector.multi_reduction <add>, %27, %cst_11 [1] : vector<8x16xf32> to vector<8xf32>
    %29 = vector.shape_cast %28 : vector<8xf32> to vector<8x1xf32>
    %30 = arith.mulf %29, %21 : vector<8x1xf32>
    %31 = vector.broadcast %21 : vector<8x1xf32> to vector<8x16xf32>
    %32 = arith.mulf %17, %31 : vector<8x16xf32>
    %33 = arith.truncf %32 : vector<8x16xf32> to vector<8x16xbf16>
    %34 = arith.index_cast %c0_i32 : i32 to index
    %c0_12 = arith.constant 0 : index
    %c0_13 = arith.constant 0 : index
    %35 = vector.load %arg6[%34, %c0_12, %c0_13] : memref<2x8x16xbf16, #tpu.memory_space<vmem>>, vector<1x8x16xbf16>
    %36 = vector.shape_cast %35 : vector<1x8x16xbf16> to vector<8x16xbf16>
    %37 = vector.shape_cast %33 : vector<8x16xbf16> to vector<1x8x16xbf16>
    tpu.vector_store %arg6[%34, %c0_12, %c0_13], %37 {strides = array<i32>} : memref<2x8x16xbf16, #tpu.memory_space<vmem>>, vector<1x8x16xbf16>,
    %38 = arith.truncf %26 : vector<8x16xf32> to vector<8x16xbf16>
    %39 = arith.index_cast %c0_i32 : i32 to index
    %c0_14 = arith.constant 0 : index
    %c0_15 = arith.constant 0 : index
    %40 = vector.load %arg7[%39, %c0_14, %c0_15] : memref<2x8x16xbf16, #tpu.memory_space<vmem>>, vector<1x8x16xbf16>
    %41 = vector.shape_cast %40 : vector<1x8x16xbf16> to vector<8x16xbf16>
    %42 = vector.shape_cast %38 : vector<8x16xbf16> to vector<1x8x16xbf16>
    tpu.vector_store %arg7[%39, %c0_14, %c0_15], %42 {strides = array<i32>} : memref<2x8x16xbf16, #tpu.memory_space<vmem>>, vector<1x8x16xbf16>,
    %43 = arith.index_cast %c0_i32 : i32 to index
    %c0_16 = arith.constant 0 : index
    %c0_17 = arith.constant 0 : index
    %44 = vector.load %arg5[%43, %c0_16, %c0_17] : memref<2x8x1xf32, #tpu.memory_space<vmem>>, vector<1x8x1xf32>
    %45 = vector.shape_cast %44 : vector<1x8x1xf32> to vector<8x1xf32>
    %46 = vector.shape_cast %30 : vector<8x1xf32> to vector<1x8x1xf32>
    tpu.vector_store %arg5[%43, %c0_16, %c0_17], %46 {strides = array<i32>} : memref<2x8x1xf32, #tpu.memory_space<vmem>>, vector<1x8x1xf32>,
    %c1_i32 = arith.constant 1 : i32
    %47 = arith.index_cast %c1_i32 : i32 to index
    %c0_18 = arith.constant 0 : index
    %c0_19 = arith.constant 0 : index
    %48 = vector.load %arg2[%47, %c0_18, %c0_19] : memref<2x32x16xf32, #tpu.memory_space<vmem>>, vector<1x32x16xf32>
    %49 = vector.shape_cast %48 : vector<1x32x16xf32> to vector<32x16xf32>
    %50 = arith.truncf %49 : vector<32x16xf32> to vector<32x16xbf16>
    %cst_20 = arith.constant dense<0.000000e+00> : vector<16x16xf32>
    %51 = tpu.matmul %1, %50, %cst_20 {dimension_numbers = #tpu.dot_dimension_numbers<[1], [0], [0], [1], [0, 0, 1, 1], [], []>} : vector<16x32xbf16>, vector<32x16xbf16>, vector<16x16xf32> -> vector<16x16xf32>
    %52 = arith.addf %51, %5 : vector<16x16xf32>
    %53 = vector.extract_strided_slice %52 {offsets = [0, 0], sizes = [8, 16], strides = [1, 1]} : vector<16x16xf32> to vector<8x16xf32>
    %54 = vector.extract_strided_slice %52 {offsets = [8, 0], sizes = [8, 16], strides = [1, 1]} : vector<16x16xf32> to vector<8x16xf32>
    %55 = math.tanh %53 : vector<8x16xf32>
    %cst_21 = arith.constant 1.000000e+00 : f32
    %56 = vector.broadcast %cst_21 : f32 to vector<8x16xf32>
    %57 = arith.subf %55, %56 : vector<8x16xf32>
    %58 = math.exp %57 : vector<8x16xf32>
    %cst_22 = arith.constant dense<0.000000e+00> : vector<8xf32>
    %59 = vector.multi_reduction <add>, %58, %cst_22 [1] : vector<8x16xf32> to vector<8xf32>
    %60 = vector.shape_cast %59 : vector<8xf32> to vector<8x1xf32>
    %cst_23 = arith.constant 1.000000e+00 : f32
    %61 = vector.broadcast %cst_23 : f32 to vector<8x1xf32>
    %62 = arith.divf %61, %60 : vector<8x1xf32>
    %63 = arith.negf %54 : vector<8x16xf32>
    %64 = math.exp %63 : vector<8x16xf32>
    %cst_24 = arith.constant 1.000000e+00 : f32
    %65 = vector.broadcast %cst_24 : f32 to vector<8x16xf32>
    %66 = arith.addf %65, %64 : vector<8x16xf32>
    %67 = arith.divf %65, %66 : vector<8x16xf32>
    %68 = arith.mulf %58, %67 : vector<8x16xf32>
    %cst_25 = arith.constant dense<0.000000e+00> : vector<8xf32>
    %69 = vector.multi_reduction <add>, %68, %cst_25 [1] : vector<8x16xf32> to vector<8xf32>
    %70 = vector.shape_cast %69 : vector<8xf32> to vector<8x1xf32>
    %71 = arith.mulf %70, %62 : vector<8x1xf32>
    %72 = vector.broadcast %62 : vector<8x1xf32> to vector<8x16xf32>
    %73 = arith.mulf %58, %72 : vector<8x16xf32>
    %74 = arith.truncf %73 : vector<8x16xf32> to vector<8x16xbf16>
    %75 = arith.index_cast %c1_i32 : i32 to index
    %c0_26 = arith.constant 0 : index
    %c0_27 = arith.constant 0 : index
    %76 = vector.load %arg6[%75, %c0_26, %c0_27] : memref<2x8x16xbf16, #tpu.memory_space<vmem>>, vector<1x8x16xbf16>
    %77 = vector.shape_cast %76 : vector<1x8x16xbf16> to vector<8x16xbf16>
    %78 = vector.shape_cast %74 : vector<8x16xbf16> to vector<1x8x16xbf16>
    tpu.vector_store %arg6[%75, %c0_26, %c0_27], %78 {strides = array<i32>} : memref<2x8x16xbf16, #tpu.memory_space<vmem>>, vector<1x8x16xbf16>,
    %79 = arith.truncf %67 : vector<8x16xf32> to vector<8x16xbf16>
    %80 = arith.index_cast %c1_i32 : i32 to index
    %c0_28 = arith.constant 0 : index
    %c0_29 = arith.constant 0 : index
    %81 = vector.load %arg7[%80, %c0_28, %c0_29] : memref<2x8x16xbf16, #tpu.memory_space<vmem>>, vector<1x8x16xbf16>
    %82 = vector.shape_cast %81 : vector<1x8x16xbf16> to vector<8x16xbf16>
    %83 = vector.shape_cast %79 : vector<8x16xbf16> to vector<1x8x16xbf16>
    tpu.vector_store %arg7[%80, %c0_28, %c0_29], %83 {strides = array<i32>} : memref<2x8x16xbf16, #tpu.memory_space<vmem>>, vector<1x8x16xbf16>,
    %84 = arith.index_cast %c1_i32 : i32 to index
    %c0_30 = arith.constant 0 : index
    %c0_31 = arith.constant 0 : index
    %85 = vector.load %arg5[%84, %c0_30, %c0_31] : memref<2x8x1xf32, #tpu.memory_space<vmem>>, vector<1x8x1xf32>
    %86 = vector.shape_cast %85 : vector<1x8x1xf32> to vector<8x1xf32>
    %87 = vector.shape_cast %71 : vector<8x1xf32> to vector<1x8x1xf32>
    tpu.vector_store %arg5[%84, %c0_30, %c0_31], %87 {strides = array<i32>} : memref<2x8x1xf32, #tpu.memory_space<vmem>>, vector<1x8x1xf32>,
    %c2_i32 = arith.constant 2 : i32
    return
  }
  func.func @transform_0(%arg0: i32, %arg1: i32) -> (i32, i32, i32) {
    %c0_i32 = arith.constant 0 : i32
    %c0_i32_0 = arith.constant 0 : i32
    %c0_i32_1 = arith.constant 0 : i32
    return %arg0, %c0_i32, %c0_i32_0 : i32, i32, i32
  }
  func.func @transform_1(%arg0: i32, %arg1: i32) -> (i32, i32, i32) {
    %c0_i32 = arith.constant 0 : i32
    %c0_i32_0 = arith.constant 0 : i32
    %c0_i32_1 = arith.constant 0 : i32
    return %arg1, %c0_i32, %c0_i32_0 : i32, i32, i32
  }
  func.func @transform_2(%arg0: i32, %arg1: i32) -> (i32, i32, i32) {
    %c0_i32 = arith.constant 0 : i32
    %c0_i32_0 = arith.constant 0 : i32
    %c0_i32_1 = arith.constant 0 : i32
    return %arg1, %c0_i32, %c0_i32_0 : i32, i32, i32
  }
  func.func @transform_3(%arg0: i32, %arg1: i32) -> (i32, i32, i32) {
    %c0_i32 = arith.constant 0 : i32
    %c0_i32_0 = arith.constant 0 : i32
    return %arg0, %arg1, %c0_i32 : i32, i32, i32
  }
  func.func @transform_4(%arg0: i32, %arg1: i32) -> (i32, i32, i32) {
    %c0_i32 = arith.constant 0 : i32
    %c0_i32_0 = arith.constant 0 : i32
    return %arg0, %arg1, %c0_i32 : i32, i32, i32
  }
  func.func @transform_5(%arg0: i32, %arg1: i32) -> (i32, i32, i32) {
    %c0_i32 = arith.constant 0 : i32
    %c0_i32_0 = arith.constant 0 : i32
    return %arg0, %arg1, %c0_i32 : i32, i32, i32
  }
}

</mosaic_0001>

<llo_original>
// kernel: tpu_custom_call.1
$region0: #{tpu_custom_call.1}
  #allocation0 [shape = 'u32[]', space=smem, size = 0x4, offset = 0x4, fixed_abs, tag = 'smem constant byte address 0x4 - core index']
  #allocation1 [shape = 'u32[72,128]{1,0:T(1,128)}', space=vmem, size = 0x9000, scoped, tag = 'internal scratch']
  %s0 = inlined_call_operand.vmem [shape: f32[2,32,16], index: 0, kind: input, shape index: {}]
  %s1 = inlined_call_operand.vmem [shape: bf16[1,16,32], index: 1, kind: input, shape index: {}]
  %s2 = inlined_call_operand.vmem [shape: f32[1,16,1], index: 2, kind: input, shape index: {}]
  %s3 = inlined_call_operand.vmem [shape: f32[2,8,1], index: 3, kind: output, shape index: {0}]
  %s4 = inlined_call_operand.hbm [shape: bf16[2,8,16], index: 4, kind: output, shape index: {1}]
  %s5 = inlined_call_operand.hbm [shape: bf16[2,8,16], index: 5, kind: output, shape index: {2}]
  %6 = xla_tuple %s3, %s4, %s5
  %s7 = sld [smem:[#allocation0]]
  $region38: #{tpu_custom_call.1} parent=0
    _
  %s9 = ssub.s32 1, %s7
  %s10 = scalar_select 0, %s9, %s7
  $region1: #{tpu_custom_call.1} parent=0
    #allocation2 [shape = 'u8[4096]{0}', space=vmem, size = 0x1000, scoped, tag = 'output window, operand 1, single buffered']
    #allocation3 [shape = 's32[1]{0}', space=sflag, size = 0x4, scoped, tag = 'scoped memory for tpu_custom_call.1']
    #allocation4 [shape = 'u8[4096]{0}', space=vmem, size = 0x1000, scoped, tag = 'output window, operand 2, single buffered']
    #allocation5 [shape = 's32[1]{0}', space=sflag, size = 0x4, scoped, tag = 'scoped memory for tpu_custom_call.1']
    %11 = vsyncpa [#allocation3], 0
    %12 = vsyncpa [#allocation5], 0
    // Predicated region
    $region2: #{tpu_custom_call.1} parent=1 // pred_check
      _
    $region3: #{tpu_custom_call.1} parent=1 // pred_check_branch
      %14 = sbr.rel (0) target = $region5
    $region4: #{tpu_custom_call.1} parent=1 // pred_region
      _
    $region5: #{tpu_custom_call.1} parent=1 // pred_fallthru
      _
    // Predicated region
    $region6: #{tpu_custom_call.1} parent=1 // pred_check
      _
    $region7: #{tpu_custom_call.1} parent=1 // pred_check_branch
      %16 = sbr.rel (0) target = $region9
    $region8: #{tpu_custom_call.1} parent=1 // pred_region
      _
    $region9: #{tpu_custom_call.1} parent=1 // pred_fallthru
      _
    // Predicated region
    $region10: #{tpu_custom_call.1} parent=1 // pred_check
      _
    $region11: #{tpu_custom_call.1} parent=1 // pred_check_branch
      %18 = sbr.rel (0) target = $region13
    $region12: #{tpu_custom_call.1} parent=1 // pred_region
      _
    $region13: #{tpu_custom_call.1} parent=1 // pred_fallthru
      _
    %v20 = vld [vmem:[%s1] sm:$0xf]
    %v21 = vld [vmem:[%s1 + $0x4] sm:$0xf]
    %v22 = vld [vmem:[%s2] sm:$0xff]
    %v23 = vld [vmem:[%s2 + $0x8] sm:$0xff]
    %25 = vset.pattern.permute.xlu0 0
    %26 = vperm.xlu0 %25, %v22
    %v27 = vpop.permute.xlu0 %26
    %30 = vset.pattern.permute.xlu0 0
    %31 = vperm.xlu0 %30, %v23
    %v32 = vpop.permute.xlu0 %31
    %v34 = vld [vmem:[%s0] sm:$0xff]
    %v35 = vld [vmem:[%s0 + $0x8] sm:$0xff]
    %v36 = vld [vmem:[%s0 + $0x10] sm:$0xff]
    %v37 = vld [vmem:[%s0 + $0x18] sm:$0xff]
    %v38 = vpack.c.bf16 %v35, %v34
    %v39 = vpack.c.bf16 %v37, %v36
    %v42 = vunpack.c.l.b16 %v20
    %v43 = vunpack.c.l.b16 %v21
    %v44 = vpack.c.b16 %v43, %v42
    %vm45 = vcmask 261120
    %v47 = vsel %vm45, %v44, 0
    %49 = vmatpush.bf16.msra.mxu0 0
    %50 = vmatpush.bf16.msra.mxu0 0
    %51 = vmatpush.bf16.msra.mxu0 0
    %52 = vmatpush.bf16.msra.mxu0 0
    %53 = vmatpush.bf16.msra.mxu0 0
    %54 = vmatpush.bf16.msra.mxu0 0
    %55 = vmatpush.bf16.msra.mxu0 %v39
    %56 = vmatpush.bf16.msra.mxu0 %v38
    %57 = vmatmul.bf16.gmra.mxu0 %v47
    %v58 = vpop.f32.mrf.mxu0
    %v59 = vadd.f32 %v27, %v58
    %v60 = vpop.f32.mrf.mxu0
    %v61 = vadd.f32 %v32, %v60
    %62 = vdwg.mxu0
    %v63 = vtanh.pop %v59
    %v64 = vsub.f32 %v63, 1.0
    %v65 = vmul.f32 %v64, 1.442695
    %v66 = vpow.pop %v65
    %vm67 = vcmask 130048
    %v68 = vsel %vm67, %v66, 0.0
    %69 = vadd.xlane.f32.xlu0 %v68
    %v70 = vpop.xlane.xlu0 %69
    %v71 = vrcp.pop %v70
    %v72 = vmul.f32 %v70, %v71
    %v73 = vsub.f32 1.0, %v72
    %v74 = vmul.f32 %v71, %v73
    %v75 = vadd.f32 %v71, %v74
    %vm76 = vweird.f32 %v70
    %vm77 = vweird.f32 %v71
    %vm78 = vmor %vm76, %vm77
    %v79 = vsel %vm78, %v71, %v75
    %v80 = vand.u32 2147483647, %v70
    %vm81 = vcmp.eq.f32.partialorder %v80, 8.507059e+37
    %v82 = vand.u32 %v70, 2147483648
    %v83 = vor.u32 1.1754944e-38, %v82
    %v84 = vsel %vm81, %v83, %v79
    %v85 = vmul.f32 1.0, %v84
    %v86 = vxor.u32 %v61, 2147483648
    %v87 = vmul.f32 %v86, 1.442695
    %v88 = vpow.pop %v87
    %v89 = vadd.f32 %v88, 1.0
    %v90 = vrcp.pop %v89
    %v91 = vmul.f32 %v89, %v90
    %v92 = vsub.f32 1.0, %v91
    %v93 = vmul.f32 %v90, %v92
    %v94 = vadd.f32 %v90, %v93
    %vm95 = vweird.f32 %v89
    %vm96 = vweird.f32 %v90
    %vm97 = vmor %vm95, %vm96
    %v98 = vsel %vm97, %v90, %v94
    %v99 = vand.u32 2147483647, %v89
    %vm100 = vcmp.eq.f32.partialorder %v99, 8.507059e+37
    %v101 = vand.u32 %v89, 2147483648
    %v102 = vor.u32 1.1754944e-38, %v101
    %v103 = vsel %vm100, %v102, %v98
    %v104 = vmul.f32 1.0, %v103
    %v105 = vmul.f32 %v66, %v104
    %v106 = vsel %vm67, %v105, 0.0
    %107 = vadd.xlane.f32.xlu0 %v106
    %v108 = vpop.xlane.xlu0 %107
    %v109 = vmul.f32 %v108, %v85
    %v110 = vmul.f32 %v66, %v85
    %v111 = vpack.c.bf16 %v110, %v110
    %vm112 = vcmask 125952
    %113 = vst.msk [vmem:[#allocation2] sm:$0xf] %vm112, %v111
    %v114 = vpack.c.bf16 %v104, %v104
    %115 = vst.msk [vmem:[#allocation4] sm:$0xf] %vm112, %v114
    %vm116 = vcmask 7168
    %117 = vst.msk [vmem:[%s3] sm:$0xff] %vm116, %v109
    %s118 = scalar_lea.vmem %s0, 32
    %v119 = vld [vmem:[%s118] sm:$0xff]
    %v120 = vld [vmem:[%s118 + $0x8] sm:$0xff]
    %v121 = vld [vmem:[%s118 + $0x10] sm:$0xff]
    %v122 = vld [vmem:[%s118 + $0x18] sm:$0xff]
    %v123 = vpack.c.bf16 %v120, %v119
    %v124 = vpack.c.bf16 %v122, %v121
    %125 = vmatpush.bf16.msra.mxu0 0
    %126 = vmatpush.bf16.msra.mxu0 0
    %127 = vmatpush.bf16.msra.mxu0 0
    %128 = vmatpush.bf16.msra.mxu0 0
    %129 = vmatpush.bf16.msra.mxu0 0
    %130 = vmatpush.bf16.msra.mxu0 0
    %131 = vmatpush.bf16.msra.mxu0 %v124
    %132 = vmatpush.bf16.msra.mxu0 %v123
    %133 = vmatmul.bf16.gmra.mxu0 %v47
    %v134 = vpop.f32.mrf.mxu0
    %v135 = vadd.f32 %v27, %v134
    %v136 = vpop.f32.mrf.mxu0
    %v137 = vadd.f32 %v32, %v136
    %138 = vdwg.mxu0
    %v139 = vtanh.pop %v135
    %v140 = vsub.f32 %v139, 1.0
    %v141 = vmul.f32 %v140, 1.442695
    %v142 = vpow.pop %v141
    %v143 = vsel %vm67, %v142, 0.0
    %144 = vadd.xlane.f32.xlu0 %v143
    %v145 = vpop.xlane.xlu0 %144
    %v146 = vrcp.pop %v145
    %v147 = vmul.f32 %v145, %v146
    %v148 = vsub.f32 1.0, %v147
    %v149 = vmul.f32 %v146, %v148
    %v150 = vadd.f32 %v146, %v149
    %vm151 = vweird.f32 %v145
    %vm152 = vweird.f32 %v146
    %vm153 = vmor %vm151, %vm152
    %v154 = vsel %vm153, %v146, %v150
    %v155 = vand.u32 2147483647, %v145
    %vm156 = vcmp.eq.f32.partialorder %v155, 8.507059e+37
    %v157 = vand.u32 %v145, 2147483648
    %v158 = vor.u32 1.1754944e-38, %v157
    %v159 = vsel %vm156, %v158, %v154
    %v160 = vmul.f32 1.0, %v159
    %v161 = vxor.u32 %v137, 2147483648
    %v162 = vmul.f32 %v161, 1.442695
    %v163 = vpow.pop %v162
    %v164 = vadd.f32 %v163, 1.0
    %v165 = vrcp.pop %v164
    %v166 = vmul.f32 %v164, %v165
    %v167 = vsub.f32 1.0, %v166
    %v168 = vmul.f32 %v165, %v167
    %v169 = vadd.f32 %v165, %v168
    %vm170 = vweird.f32 %v164
    %vm171 = vweird.f32 %v165
    %vm172 = vmor %vm170, %vm171
    %v173 = vsel %vm172, %v165, %v169
    %v174 = vand.u32 2147483647, %v164
    %vm175 = vcmp.eq.f32.partialorder %v174, 8.507059e+37
    %v176 = vand.u32 %v164, 2147483648
    %v177 = vor.u32 1.1754944e-38, %v176
    %v178 = vsel %vm175, %v177, %v173
    %v179 = vmul.f32 1.0, %v178
    %v180 = vmul.f32 %v142, %v179
    %v181 = vsel %vm67, %v180, 0.0
    %182 = vadd.xlane.f32.xlu0 %v181
    %v183 = vpop.xlane.xlu0 %182
    %v184 = vmul.f32 %v183, %v160
    %v185 = vmul.f32 %v142, %v160
    %v186 = vpack.c.bf16 %v185, %v185
    %s187 = scalar_lea.vmem [#allocation2], 4
    %188 = vst.msk [vmem:[%s187] sm:$0xf] %vm112, %v186
    %v189 = vpack.c.bf16 %v179, %v179
    %s190 = scalar_lea.vmem [#allocation4], 4
    %191 = vst.msk [vmem:[%s190] sm:$0xf] %vm112, %v189
    %s192 = scalar_lea.vmem %s3, 8
    %193 = vst.msk [vmem:[%s192] sm:$0xff] %vm116, %v184
    // Predicated region
    $region14: #{tpu_custom_call.1} parent=1 // pred_check
      _
    $region15: #{tpu_custom_call.1} parent=1 // pred_check_branch
      %195 = sbr.rel (0) target = $region17
    $region16: #{tpu_custom_call.1} parent=1 // pred_region
      _
    $region17: #{tpu_custom_call.1} parent=1 // pred_fallthru
      _
    // Predicated region
    $region18: #{tpu_custom_call.1} parent=1 // pred_check
      _
    $region19: #{tpu_custom_call.1} parent=1 // pred_check_branch
      %197 = sbr.rel (0) target = $region21
    $region20: #{tpu_custom_call.1} parent=1 // pred_region
      %199 = vsyncadd [#allocation3], 0
      %s200 = sshll.u32 [#allocation2], 4
      %s201 = int_to_ptr.vmem [resolvable:$true] %s200
      %s202 = sshll.u32 %s4, 4
      %s203 = int_to_ptr.hbm [resolvable:$true] %s202
      %208 = dma.vmem_to_hbm [thread:$0]  %s201, 128, %s203, [#allocation3], 64, 64, 4
    $region21: #{tpu_custom_call.1} parent=1 // pred_fallthru
      _
    // Predicated region
    $region22: #{tpu_custom_call.1} parent=1 // pred_check
      _
    $region23: #{tpu_custom_call.1} parent=1 // pred_check_branch
      %210 = sbr.rel (0) target = $region25
    $region24: #{tpu_custom_call.1} parent=1 // pred_region
      %212 = vsyncadd [#allocation5], 0
      %s213 = sshll.u32 [#allocation4], 4
      %s214 = int_to_ptr.vmem [resolvable:$true] %s213
      %s215 = sshll.u32 %s5, 4
      %s216 = int_to_ptr.hbm [resolvable:$true] %s215
      %221 = dma.vmem_to_hbm [thread:$0]  %s214, 128, %s216, [#allocation5], 64, 64, 4
    $region25: #{tpu_custom_call.1} parent=1 // pred_fallthru
      _
    // Predicated region
    $region26: #{tpu_custom_call.1} parent=1 // pred_check
      _
    $region27: #{tpu_custom_call.1} parent=1 // pred_check_branch
      %223 = sbr.rel (0) target = $region29
    $region28: #{tpu_custom_call.1} parent=1 // pred_region
      _
    $region29: #{tpu_custom_call.1} parent=1 // pred_fallthru
      _
    // Predicated region
    $region30: #{tpu_custom_call.1} parent=1 // pred_check
      _
    $region31: #{tpu_custom_call.1} parent=1 // pred_check_branch
      %225 = sbr.rel (0) target = $region33
    $region32: #{tpu_custom_call.1} parent=1 // pred_region
      %227 = dma.done [#allocation3], 128
    $region33: #{tpu_custom_call.1} parent=1 // pred_fallthru
      _
    // Predicated region
    $region34: #{tpu_custom_call.1} parent=1 // pred_check
      _
    $region35: #{tpu_custom_call.1} parent=1 // pred_check_branch
      %229 = sbr.rel (0) target = $region37
    $region36: #{tpu_custom_call.1} parent=1 // pred_region
      %231 = dma.done [#allocation5], 128
    $region37: #{tpu_custom_call.1} parent=1 // pred_fallthru
      _
    %232 = vsyncpa [#allocation3], 1
    %233 = vsyncpa [#allocation5], 1

</llo_original>
